<compile_context>
chip_gen: v6e
topology: v6e:2x2x1
jax: 0.10.0
libtpu: 0.0.40
codegen_flags: <defaults>
</compile_context>

<pallas_src>
import math

import jax
import jax.numpy as jnp
from jax.experimental import pallas as pl
from jax.experimental.pallas import tpu as pltpu


# Lane widths tried for the shape-independent 2D presentation (largest first).
_LANE_CANDIDATES = (2048, 1024, 512, 256, 128)
# Up to this many concurrent DMAs; only split when each chunk stays >= 1 MiB.
_MAX_DMA_CHUNKS = 4
_MIN_CHUNK_BYTES = 1 << 20


def _row_chunks(rows, row_bytes):
    """Split `rows` into up to _MAX_DMA_CHUNKS contiguous static chunks."""
    total_bytes = rows * row_bytes
    n = int(min(_MAX_DMA_CHUNKS, rows, max(1, total_bytes // _MIN_CHUNK_BYTES)))
    base, rem = divmod(rows, n)
    chunks, start = [], 0
    for i in range(n):
        size = base + (1 if i < rem else 0)
        if size:
            chunks.append((start, size))
            start += size
    return chunks


def _make_flatten_dma_kernel_2d(chunks):
    """Kernel: copy a (rows, L) HBM slab to the output via chunked DMAs."""

    def kernel(x_ref, o_ref, sems):
        copies = []
        for ci, (r0, rn) in enumerate(chunks):          # static Python ints
            cp = pltpu.make_async_copy(
                x_ref.at[pl.ds(r0, rn), :],
                o_ref.at[pl.ds(r0, rn), :],
                sems.at[ci],
            )
            cp.start()
            copies.append(cp)
        for cp in copies:                               # overlap all, then wait
            cp.wait()

    return kernel


def _flatten_dma_kernel_1d(x_ref, o_ref, sems):
    """Fallback kernel: one whole-array HBM->HBM DMA over the 1D view."""
    cp = pltpu.make_async_copy(x_ref, o_ref, sems.at[0])
    cp.start()
    cp.wait()


def _pallas_flatten_flat(x1d):
    """Copy a flat (total,) array through a grid-less Pallas DMA kernel."""
    total = x1d.shape[0]
    itemsize = jnp.dtype(x1d.dtype).itemsize
    cost = pl.CostEstimate(flops=0, transcendentals=0,
                           bytes_accessed=2 * total * itemsize)

    lane = next((l for l in _LANE_CANDIDATES if total % l == 0), None)
    if lane is None:
        # Total not divisible by 128: single contiguous DMA over the 1D view.
        return pl.pallas_call(
            _flatten_dma_kernel_1d,
            out_shape=jax.ShapeDtypeStruct((total,), x1d.dtype),
            in_specs=[pl.BlockSpec(memory_space=pl.ANY)],
            out_specs=pl.BlockSpec(memory_space=pl.ANY),
            scratch_shapes=[pltpu.SemaphoreType.DMA((1,))],
            cost_estimate=cost,
        )(x1d)

    rows = total // lane
    chunks = _row_chunks(rows, lane * itemsize)
    x2d = jnp.reshape(x1d, (rows, lane))                # free, metadata only
    out2d = pl.pallas_call(
        _make_flatten_dma_kernel_2d(chunks),
        out_shape=jax.ShapeDtypeStruct((rows, lane), x1d.dtype),
        in_specs=[pl.BlockSpec(memory_space=pl.ANY)],
        out_specs=pl.BlockSpec(memory_space=pl.ANY),
        scratch_shapes=[pltpu.SemaphoreType.DMA((len(chunks),))],
        cost_estimate=cost,
    )(x2d)
    return jnp.reshape(out2d, (total,))                 # free, metadata only


class Flatten:
    """JAX/Pallas equivalent of the PyTorch Flatten module."""

    def __init__(self, bs=False):
        self.bs = bs

    def __call__(self, x):
        n = x.shape[0]
        # C-order flatten matches torch .view semantics exactly.
        flat = _pallas_flatten_flat(jnp.reshape(x, (-1,)))
        if self.bs:
            return jnp.reshape(flat, (n, -1))           # (N, C*H*W)
        return flat                                      # (N*C*H*W,)


if __name__ == "__main__":
    key = jax.random.PRNGKey(0)
    k0, k1, k2, k3 = jax.random.split(key, 4)

    # Small NCHW input consistent with a conv-net feature map.
    x = jax.random.normal(k0, (2, 4, 16, 16), dtype=jnp.float32)

    # Default module config (bs=False): flatten to 1D.
    y = jax.block_until_ready(Flatten(bs=False)(x))
    assert y.shape == (2 * 4 * 16 * 16,)
    assert jnp.array_equal(y, x.reshape(-1))

    # bs=True: flatten keeping the batch dim.
    y_bs = jax.block_until_ready(Flatten(bs=True)(x))
    assert y_bs.shape == (2, 4 * 16 * 16)
    assert jnp.array_equal(y_bs, x.reshape(2, -1))

    # Larger feature dim (single-DMA 2D path, lane-dense presentation).
    x_big = jax.random.normal(k1, (16, 8, 32, 32), dtype=jnp.float32)
    y_big = jax.block_until_ready(Flatten(bs=True)(x_big))
    assert y_big.shape == (16, 8 * 32 * 32)
    assert jnp.array_equal(y_big, x_big.reshape(16, -1))

    # Large enough to exercise the multi-DMA chunking (2 MiB -> 2 chunks).
    x_huge = jax.random.normal(k2, (4, 8, 128, 128), dtype=jnp.float32)
    y_huge = jax.block_until_ready(Flatten(bs=False)(x_huge))
    assert jnp.array_equal(y_huge, x_huge.reshape(-1))

    # Total not divisible by 128 -> 1D whole-array DMA fallback; also bf16.
    x_odd = jax.random.normal(k3, (2, 3, 5, 7), dtype=jnp.bfloat16)
    y_odd = jax.block_until_ready(Flatten(bs=True)(x_odd))
    assert y_odd.shape == (2, 3 * 5 * 7)
    assert jnp.array_equal(y_odd, x_odd.reshape(2, -1))

    print("KERNEL_OK")
</pallas_src>

<mosaic_0001>
module attributes {stable_mosaic.version = 11 : i64} {
  func.func @kernel(%arg0: memref<1x2048xf32, #tpu.memory_space<any>>, %arg1: memref<1x2048xf32, #tpu.memory_space<any>>, %arg2: memref<1x!tpu.dma_semaphore, #tpu.memory_space<semaphore_mem>>) attributes {dimension_semantics = [], scalar_prefetch = 0 : i64, scratch_operands = 1 : i64, tpu.core_type = #tpu.core_type<tc>} {
    %c0_i32 = arith.constant 0 : i32
    %c0_i32_0 = arith.constant 0 : i32
    %c0_i32_1 = arith.constant 0 : i32
    %0 = tpu.memref_slice %arg0[%c0_i32_0, %c0_i32_1] : memref<1x2048xf32, #tpu.memory_space<any>> -> memref<1x2048xf32, #tpu.memory_space<any>>
    %c0_i32_2 = arith.constant 0 : i32
    %c0_i32_3 = arith.constant 0 : i32
    %1 = tpu.memref_slice %arg1[%c0_i32_2, %c0_i32_3] : memref<1x2048xf32, #tpu.memory_space<any>> -> memref<1x2048xf32, #tpu.memory_space<any>>
    %2 = tpu.memref_slice %arg2[%c0_i32] : memref<1x!tpu.dma_semaphore, #tpu.memory_space<semaphore_mem>> -> memref<1x!tpu.dma_semaphore, #tpu.memory_space<semaphore_mem>>
    %3 = tpu.memref_squeeze %2 : memref<1x!tpu.dma_semaphore, #tpu.memory_space<semaphore_mem>> -> memref<!tpu.dma_semaphore, #tpu.memory_space<semaphore_mem>>
    tpu.enqueue_dma source(%0 : memref<1x2048xf32, #tpu.memory_space<any>>) target(%1 : memref<1x2048xf32, #tpu.memory_space<any>>) target_semaphore(%3 : memref<!tpu.dma_semaphore, #tpu.memory_space<semaphore_mem>>)
    %c0_i32_4 = arith.constant 0 : i32
    %c0_i32_5 = arith.constant 0 : i32
    %c0_i32_6 = arith.constant 0 : i32
    %4 = tpu.memref_slice %arg0[%c0_i32_5, %c0_i32_6] : memref<1x2048xf32, #tpu.memory_space<any>> -> memref<1x2048xf32, #tpu.memory_space<any>>
    %c0_i32_7 = arith.constant 0 : i32
    %c0_i32_8 = arith.constant 0 : i32
    %5 = tpu.memref_slice %arg1[%c0_i32_7, %c0_i32_8] : memref<1x2048xf32, #tpu.memory_space<any>> -> memref<1x2048xf32, #tpu.memory_space<any>>
    %6 = tpu.memref_slice %arg2[%c0_i32_4] : memref<1x!tpu.dma_semaphore, #tpu.memory_space<semaphore_mem>> -> memref<1x!tpu.dma_semaphore, #tpu.memory_space<semaphore_mem>>
    %7 = tpu.memref_squeeze %6 : memref<1x!tpu.dma_semaphore, #tpu.memory_space<semaphore_mem>> -> memref<!tpu.dma_semaphore, #tpu.memory_space<semaphore_mem>>
    tpu.wait_dma2 semaphore(%7 : memref<!tpu.dma_semaphore, #tpu.memory_space<semaphore_mem>>) src(%4 : memref<1x2048xf32, #tpu.memory_space<any>>) dst(%5 : memref<1x2048xf32, #tpu.memory_space<any>>)
    return
  }
}

</mosaic_0001>

<llo_original>
// kernel: tpu_custom_call.1
$region0: #{tpu_custom_call.1}
  #allocation0 [shape = 'u32[]', space=smem, size = 0x4, offset = 0x4, fixed_abs, tag = 'smem constant byte address 0x4 - core index']
  #allocation1 [shape = 'u32[144,128]{1,0:T(1,128)}', space=vmem, size = 0x12000, scoped, tag = 'internal scratch']
  #allocation2 [shape = 's32[1]{0}', space=sflag, size = 0x4, scoped, tag = 'scratch operand']
  #allocation3 [shape = 's32[]', space=sflag, size = 0x4, offset = 0, fixed_abs, tag = 'sflag constant byte address 0x0 - dummy sync flag']
  #allocation4 [shape = 'u32[0]{0}', space=smem, size = 0, offset = 0, fixed_abs, tag = 'smem constant byte address 0x0 - null']
  %s0 = inlined_call_operand.hbm [shape: f32[1,2048], index: 0, kind: input, shape index: {}]
  %s1 = inlined_call_operand.hbm [shape: f32[1,2048], index: 1, kind: output, shape index: {}]
  %s2 = sld [smem:[#allocation0]]
  $region2: #{tpu_custom_call.1} parent=0
    _
  %s4 = ssub.s32 1, %s2
  %s5 = scalar_select 0, %s4, %s2
  %s7 = sshll.u32 1, 14
  %s8 = sxor.u32 4294967295, %s7
  %12 = dma.general %s0, 256, %s1, [#allocation2], 131072, [#allocation4], 0, 0
  %s13 = smul.u32 1, 16
  %s14 = sshll.u32 %s13, 4
  %15 = dma.done [#allocation2], %s14
  %16 = vsyncmov [#allocation2]
  %s17 = vpop.sfrf %16
  %p18 = scmp.eq.s32.totalorder %s17, 0
  %p19 = pneg %p18
  %21 = shalt.err (%p19)

</llo_original>
